<compile_context>
chip_gen: v7x
topology: tpu7x:2x2x1
jax: 0.10.0
libtpu: 0.0.40
codegen_flags: <defaults>
</compile_context>

<pallas_src>
import functools

import jax
import jax.numpy as jnp
from jax.experimental import pallas as pl
from jax.experimental.pallas import tpu as pltpu


def _vmem_budget_bytes():
    """~80% of this generation's per-core VMEM (v7x: 64 MiB, v5e/v6e: 128 MiB)."""
    cap = None
    try:
        cap = getattr(pltpu.get_tpu_info(), "vmem_capacity_bytes", None)
    except Exception:
        cap = None
    if not cap or cap <= 0:
        cap = 64 << 20  # conservative default: v7x per-TensorCore VMEM
    return int(cap * 0.8)


def _lane_fold(v, width):
    """(C, m*width) -> (C, width) by summing lane-aligned strips.

    Slices at 128-lane-aligned offsets are vreg selection (free); the adds are pure VALU
    (no XLU, no relayout).  Four interleaved partials keep the dependency chain short so
    the fold hides under the EUP/XLU/DMA work of the rest of the tile.
    """
    n = v.shape[1] // width
    if n <= 1:
        return v
    k_par = min(4, n)
    parts = [v[:, k * width:(k + 1) * width] for k in range(k_par)]
    for k in range(k_par, n):
        parts[k % k_par] = parts[k % k_par] + v[:, k * width:(k + 1) * width]
    out = parts[0]
    for q in parts[1:]:
        out = out + q
    return out


def _wce_fused_kernel(x_ref, t_ref, prob_ref, nll_ref, cnt_ref,
                      acc_p, acc_n, acc_c, *, hw, tm, tiles_per_group, acc_w,
                      ignore_index, ragged):
    """Fused single pass over one (C, TM) tile of one (batch, tile-group) slice.

    Accumulates into narrow (C, ACC_W) f32 VMEM scratch:
      acc_p[c, :] : softmax probability of class c            (all positions)
      acc_n[c, :] : (lse - x_c) where target == c             (valid positions only)
      acc_c[c, :] : 1.0 where target == c                     (valid positions only)
    """
    jt = pl.program_id(2)

    @pl.when(jt == 0)
    def _():
        acc_p[...] = jnp.zeros_like(acc_p)
        acc_n[...] = jnp.zeros_like(acc_n)
        acc_c[...] = jnp.zeros_like(acc_c)

    x = x_ref[...].astype(jnp.float32)      # (C, TM); cast in-kernel so bf16 stays bf16 in HBM
    t = t_ref[...]                          # (1, TM) int32 targets

    # Numerically stable softmax / log-sum-exp over the class (sublane) axis.
    m = jnp.max(x, axis=0, keepdims=True)   # (1, TM)   XLU
    e = jnp.exp(x - m)                      # (C, TM)   EUP
    s = jnp.sum(e, axis=0, keepdims=True)   # (1, TM)   XLU
    # EUP approximate reciprocal + one Newton step on the narrow (1, TM) vector: ~f32 exact,
    # so no bias leaks into the class-weight denominator.
    r = pl.reciprocal(s, approx=True)
    r = r * (2.0 - s * r)
    p = e * r                               # softmax   (C, TM)
    lse = m + jnp.log(s)                    # (1, TM)

    # One-hot of the target class via a tiny (C, 1) class iota.
    cls = jax.lax.broadcasted_iota(jnp.int32, (x.shape[0], 1), 0)
    onehot = cls == t                       # (C, TM) bool
    valid = t != ignore_index               # (1, TM) bool

    if ragged:
        # Only traced when HW % TM != 0 (the wrapper prefers divisor tile widths, so this
        # path is rare).  Garbage columns of the global last tile are masked out of ALL
        # accumulators with NaN-safe selects.
        j_glob = pl.program_id(1) * tiles_per_group + jt
        col = j_glob * tm + jax.lax.broadcasted_iota(jnp.int32, (1, tm), 1)
        in_bounds = col < hw
        valid = jnp.logical_and(valid, in_bounds)
        p = jnp.where(in_bounds, p, 0.0)

    sel = jnp.logical_and(onehot, valid)    # (C, TM)

    acc_p[...] += _lane_fold(p, acc_w)
    acc_n[...] += _lane_fold(jnp.where(sel, lse - x, 0.0), acc_w)
    acc_c[...] += _lane_fold(sel.astype(jnp.float32), acc_w)

    # Cross-lane reduce + narrow (C, 1) stores only once per (batch, group) slice.
    @pl.when(jt == pl.num_programs(2) - 1)
    def _():
        prob_ref[...] = jnp.sum(acc_p[...], axis=1, keepdims=True)
        nll_ref[...] = jnp.sum(acc_n[...], axis=1, keepdims=True)
        cnt_ref[...] = jnp.sum(acc_c[...], axis=1, keepdims=True)


def weighted_cross_entropy_loss(logits, target, ignore_index=-1, max_tm=65536):
    """logits: (N, C, *spatial) float, target: (N, *spatial) int.  Returns scalar f32 loss.

    Matches torch:  F.cross_entropy(logits, target, weight=wce_class_weights(logits),
                                    ignore_index=ignore_index)   (reduction='mean').
    """
    N, C = logits.shape[0], logits.shape[1]

    # Free reshapes only -- no moveaxis transpose, no pad copy.
    x3d = logits.reshape(N, C, -1)                        # (N, C, HW), native dtype
    t3d = target.reshape(N, 1, -1).astype(jnp.int32)      # (N, 1, HW)
    HW = x3d.shape[2]
    isz = jnp.dtype(x3d.dtype).itemsize

    # ---- Tile-width selection: scale tm with C / dtype against a per-generation VMEM
    # budget; target ~2 MiB of logits per block so the ~0.35 us/step grid overhead is a
    # small fraction of the per-step HBM time on every generation.
    budget = _vmem_budget_bytes()
    headroom = 2 << 20                                    # Mosaic internal scratch etc.
    per_col = 2 * (C * isz + 4)                           # double-buffered logits + targets
    scratch_cap = 3 * C * 256 * 4                         # accumulators are at most (C, 256)
    avail = max(budget - headroom - scratch_cap, per_col * 128)
    tm_fit = avail // per_col
    tm_target = max((2 << 20) // max(C * isz, 1), 128)
    tm_max = int(min(tm_fit, tm_target, max_tm))
    tm_max = max((tm_max // 128) * 128, 128)
    # TODO(synk): for vocabulary-scale C (where even a 128-wide block overflows VMEM) add a
    # class-axis grid split with an online softmax; segmentation-scale C always fits here.

    if HW <= tm_max:
        tm, ragged = HW, False                            # single full-extent tile (legal block)
    else:
        tm = 0
        # Prefer a multiple-of-128 divisor of HW so the ragged-mask path is never emitted.
        for cand in range(tm_max, max(tm_max // 2, 128) - 1, -128):
            if HW % cand == 0:
                tm, ragged = cand, False
                break
        if tm == 0:
            tm, ragged = tm_max, (HW % tm_max) != 0

    if tm % 256 == 0:
        acc_w = 256
    elif tm % 128 == 0:
        acc_w = 128
    else:
        acc_w = tm                                        # small single-tile case

    n_tiles = pl.cdiv(HW, tm)
    # 2-way parallel split of the reduction axis keeps v7x's second TensorCore busy when the
    # batch axis alone gives an odd / too-small parallel extent; no-op on v5e/v6e (1 TC).
    G = 2 if (N % 2 == 1 and n_tiles >= 2 and n_tiles % 2 == 0) else 1
    TG = n_tiles // G

    # Explicit VMEM limit: actual need, capped at ~80% of this generation's physical VMEM.
    vmem_need = 2 * (C * tm * isz + tm * 4) + 3 * C * acc_w * 4 + 6 * C * 4 + headroom
    vmem_limit = int(max(min(max(vmem_need, 32 << 20), budget), vmem_need))

    kernel = functools.partial(_wce_fused_kernel, hw=HW, tm=tm, tiles_per_group=TG,
                               acc_w=acc_w, ignore_index=ignore_index, ragged=ragged)

    prob_parts, nll_parts, cnt_parts = pl.pallas_call(
        kernel,
        out_shape=(jax.ShapeDtypeStruct((N, G, C, 1), jnp.float32),
                   jax.ShapeDtypeStruct((N, G, C, 1), jnp.float32),
                   jax.ShapeDtypeStruct((N, G, C, 1), jnp.float32)),
        grid=(N, G, TG),
        in_specs=[pl.BlockSpec((None, C, tm), lambda n, g, j: (n, 0, g * TG + j)),
                  pl.BlockSpec((None, 1, tm), lambda n, g, j: (n, 0, g * TG + j))],
        out_specs=(pl.BlockSpec((None, None, C, 1), lambda n, g, j: (n, g, 0, 0)),
                   pl.BlockSpec((None, None, C, 1), lambda n, g, j: (n, g, 0, 0)),
                   pl.BlockSpec((None, None, C, 1), lambda n, g, j: (n, g, 0, 0))),
        scratch_shapes=[pltpu.VMEM((C, acc_w), jnp.float32)] * 3,
        compiler_params=pltpu.CompilerParams(
            # Batch + tile-group axes "parallel" (megacore), tile axis "arbitrary"
            # (sequential reduction with resident VMEM accumulators).
            dimension_semantics=("parallel", "parallel", "arbitrary"),
            vmem_limit_bytes=vmem_limit),
        # NOTE: default double-buffering suffices once tm is wide; bump the logits spec to
        # pipeline_mode=pl.Buffered(3) only if profiling shows exposed DMA waits on v7x.
    )(x3d, t3d)

    # Tiny epilogue in plain JAX: combine per-(batch, group) partials, form class weights.
    prob_sum = jnp.sum(prob_parts, axis=(0, 1))[:, 0]     # (C,)  sum_i softmax_i[c]
    nll_sum = jnp.sum(nll_parts, axis=(0, 1))[:, 0]       # (C,)  sum of NLL over t_i == c
    cnt_sum = jnp.sum(cnt_parts, axis=(0, 1))[:, 0]       # (C,)  # valid positions, t_i == c

    total = jnp.float32(N * HW)
    weight = (total - prob_sum) / prob_sum                # w_c = sum(1 - p_c) / sum(p_c)
    # NOTE: if every target equals ignore_index the denominator below is 0 (same as torch).
    return jnp.sum(weight * nll_sum) / jnp.sum(weight * cnt_sum)


def reference_wce(logits, target, ignore_index=-1):
    """Pure-JAX reference mirroring torch F.cross_entropy(weight=class_weights)."""
    C = logits.shape[1]
    x32 = logits.astype(jnp.float32)
    p = jax.nn.softmax(x32, axis=1)
    flat = jnp.moveaxis(p, 1, 0).reshape(C, -1)
    weight = (1.0 - flat).sum(-1) / flat.sum(-1)          # (C,)
    logp_flat = jnp.moveaxis(jax.nn.log_softmax(x32, axis=1), 1, 0).reshape(C, -1)
    t_flat = target.reshape(-1)
    valid = t_flat != ignore_index
    t_safe = jnp.where(valid, t_flat, 0)
    nll = -logp_flat[t_safe, jnp.arange(t_flat.shape[0])]
    wt = weight[t_safe]
    return jnp.sum(jnp.where(valid, wt * nll, 0.0)) / jnp.sum(jnp.where(valid, wt, 0.0))


if __name__ == "__main__":
    key = jax.random.PRNGKey(0)

    def check(N, C, H, W, max_tm, rtol=1e-4):
        kx, kt = jax.random.split(jax.random.fold_in(key, N * 100000 + C * 1000 + H * 10 + W))
        x = jax.random.normal(kx, (N, C, H, W), dtype=jnp.float32)      # logits, NCHW
        t = jax.random.randint(kt, (N, H, W), 0, C, dtype=jnp.int32)    # class indices
        t = t.at[0, 0, :4].set(-1)                                      # exercise ignore_index
        loss = weighted_cross_entropy_loss(x, t, ignore_index=-1, max_tm=max_tm)
        jax.block_until_ready(loss)
        ref = reference_wce(x, t, ignore_index=-1)
        assert jnp.allclose(loss, ref, rtol=rtol, atol=1e-6), (N, C, H, W, loss, ref)

    # Primary shape from the module spec (single full-extent tile per batch element).
    check(2, 4, 16, 16, 65536)
    # Multi-tile reduction + lane-strip fold into the narrow (C, 256) accumulators.
    check(2, 4, 32, 32, 512)
    # Ragged last tile + 2-way parallel tile-group split (N == 1 keeps both v7x cores busy).
    check(1, 5, 16, 17, 256)

    print("KERNEL_OK")
</pallas_src>

<mosaic_0001>
module attributes {stable_mosaic.version = 11 : i64} {
  func.func @_wce_fused_kernel(%arg0: i32, %arg1: i32, %arg2: i32, %arg3: memref<1x4x256xf32, #tpu.memory_space<vmem>>, %arg4: memref<1x1x256xi32, #tpu.memory_space<vmem>>, %arg5: memref<1x1x4x1xf32, #tpu.memory_space<vmem>>, %arg6: memref<1x1x4x1xf32, #tpu.memory_space<vmem>>, %arg7: memref<1x1x4x1xf32, #tpu.memory_space<vmem>>, %arg8: memref<4x256xf32, #tpu.memory_space<vmem>>, %arg9: memref<4x256xf32, #tpu.memory_space<vmem>>, %arg10: memref<4x256xf32, #tpu.memory_space<vmem>>) attributes {dimension_semantics = [#tpu.dimension_semantics<parallel>, #tpu.dimension_semantics<parallel>, #tpu.dimension_semantics<arbitrary>], iteration_bounds = array<i64: 2, 1, 1>, scalar_prefetch = 0 : i64, scratch_operands = 3 : i64, tpu.core_type = #tpu.core_type<tc>, window_params = [{transform_indices = @transform_0, window_bounds = array<i64: 1, 4, 256>}, {transform_indices = @transform_1, window_bounds = array<i64: 1, 1, 256>}, {transform_indices = @transform_2, window_bounds = array<i64: 1, 1, 4, 1>}, {transform_indices = @transform_3, window_bounds = array<i64: 1, 1, 4, 1>}, {transform_indices = @transform_4, window_bounds = array<i64: 1, 1, 4, 1>}]} {
    %c0_i32 = arith.constant 0 : i32
    %0 = arith.cmpi eq, %arg2, %c0_i32 : i32
    %1 = arith.extui %0 : i1 to i32
    %c0_i32_0 = arith.constant 0 : i32
    %2 = arith.cmpi ne, %1, %c0_i32_0 : i32
    scf.if %2 {
      %cst_23 = arith.constant 0.000000e+00 : f32
      %49 = vector.broadcast %cst_23 : f32 to vector<4x256xf32>
      %c0_24 = arith.constant 0 : index
      %c0_25 = arith.constant 0 : index
      %50 = vector.load %arg8[%c0_24, %c0_25] : memref<4x256xf32, #tpu.memory_space<vmem>>, vector<4x256xf32>
      tpu.vector_store %arg8[%c0_24, %c0_25], %49 {strides = array<i32>} : memref<4x256xf32, #tpu.memory_space<vmem>>, vector<4x256xf32>,
      %cst_26 = arith.constant 0.000000e+00 : f32
      %51 = vector.broadcast %cst_26 : f32 to vector<4x256xf32>
      %c0_27 = arith.constant 0 : index
      %c0_28 = arith.constant 0 : index
      %52 = vector.load %arg9[%c0_27, %c0_28] : memref<4x256xf32, #tpu.memory_space<vmem>>, vector<4x256xf32>
      tpu.vector_store %arg9[%c0_27, %c0_28], %51 {strides = array<i32>} : memref<4x256xf32, #tpu.memory_space<vmem>>, vector<4x256xf32>,
      %cst_29 = arith.constant 0.000000e+00 : f32
      %53 = vector.broadcast %cst_29 : f32 to vector<4x256xf32>
      %c0_30 = arith.constant 0 : index
      %c0_31 = arith.constant 0 : index
      %54 = vector.load %arg10[%c0_30, %c0_31] : memref<4x256xf32, #tpu.memory_space<vmem>>, vector<4x256xf32>
      tpu.vector_store %arg10[%c0_30, %c0_31], %53 {strides = array<i32>} : memref<4x256xf32, #tpu.memory_space<vmem>>, vector<4x256xf32>,
    } else {
    }
    %c0 = arith.constant 0 : index
    %c0_1 = arith.constant 0 : index
    %c0_2 = arith.constant 0 : index
    %3 = vector.load %arg3[%c0, %c0_1, %c0_2] : memref<1x4x256xf32, #tpu.memory_space<vmem>>, vector<1x4x256xf32>
    %4 = vector.shape_cast %3 : vector<1x4x256xf32> to vector<4x256xf32>
    %c0_3 = arith.constant 0 : index
    %c0_4 = arith.constant 0 : index
    %c0_5 = arith.constant 0 : index
    %5 = vector.load %arg4[%c0_3, %c0_4, %c0_5] : memref<1x1x256xi32, #tpu.memory_space<vmem>>, vector<1x1x256xi32>
    %6 = vector.shape_cast %5 : vector<1x1x256xi32> to vector<1x256xi32>
    %cst = arith.constant dense<0xFF800000> : vector<256xf32>
    %7 = vector.multi_reduction <maximumf>, %4, %cst [0] : vector<4x256xf32> to vector<256xf32>
    %8 = vector.shape_cast %7 : vector<256xf32> to vector<1x256xf32>
    %9 = vector.broadcast %8 : vector<1x256xf32> to vector<4x256xf32>
    %10 = arith.subf %4, %9 : vector<4x256xf32>
    %11 = math.exp %10 : vector<4x256xf32>
    %cst_6 = arith.constant dense<0.000000e+00> : vector<256xf32>
    %12 = vector.multi_reduction <add>, %11, %cst_6 [0] : vector<4x256xf32> to vector<256xf32>
    %13 = vector.shape_cast %12 : vector<256xf32> to vector<1x256xf32>
    %14 = tpu.reciprocal %13 {approx = true} : vector<1x256xf32> -> vector<1x256xf32>
    %15 = arith.mulf %13, %14 : vector<1x256xf32>
    %cst_7 = arith.constant 2.000000e+00 : f32
    %16 = vector.broadcast %cst_7 : f32 to vector<1x256xf32>
    %17 = arith.subf %16, %15 : vector<1x256xf32>
    %18 = arith.mulf %14, %17 : vector<1x256xf32>
    %19 = vector.broadcast %18 : vector<1x256xf32> to vector<4x256xf32>
    %20 = arith.mulf %11, %19 : vector<4x256xf32>
    %21 = math.log %13 : vector<1x256xf32>
    %22 = arith.addf %8, %21 : vector<1x256xf32>
    %23 = tpu.iota {dimensions = array<i32: 0>} : vector<4x1xi32>
    %24 = vector.broadcast %23 : vector<4x1xi32> to vector<4x256xi32>
    %25 = vector.broadcast %6 : vector<1x256xi32> to vector<4x256xi32>
    %26 = arith.cmpi eq, %24, %25 : vector<4x256xi32>
    %c-1_i32 = arith.constant -1 : i32
    %27 = vector.broadcast %c-1_i32 : i32 to vector<1x256xi32>
    %28 = arith.cmpi ne, %6, %27 : vector<1x256xi32>
    %29 = vector.broadcast %28 : vector<1x256xi1> to vector<4x256xi1>
    %30 = arith.andi %26, %29 : vector<4x256xi1>
    %c0_8 = arith.constant 0 : index
    %c0_9 = arith.constant 0 : index
    %31 = vector.load %arg8[%c0_8, %c0_9] : memref<4x256xf32, #tpu.memory_space<vmem>>, vector<4x256xf32>
    %32 = arith.addf %31, %20 : vector<4x256xf32>
    %c0_10 = arith.constant 0 : index
    %c0_11 = arith.constant 0 : index
    %33 = vector.load %arg8[%c0_10, %c0_11] : memref<4x256xf32, #tpu.memory_space<vmem>>, vector<4x256xf32>
    tpu.vector_store %arg8[%c0_10, %c0_11], %32 {strides = array<i32>} : memref<4x256xf32, #tpu.memory_space<vmem>>, vector<4x256xf32>,
    %c0_12 = arith.constant 0 : index
    %c0_13 = arith.constant 0 : index
    %34 = vector.load %arg9[%c0_12, %c0_13] : memref<4x256xf32, #tpu.memory_space<vmem>>, vector<4x256xf32>
    %35 = vector.broadcast %22 : vector<1x256xf32> to vector<4x256xf32>
    %36 = arith.subf %35, %4 : vector<4x256xf32>
    %cst_14 = arith.constant 0.000000e+00 : f32
    %37 = vector.broadcast %cst_14 : f32 to vector<4x256xf32>
    %38 = arith.select %30, %36, %37 : vector<4x256xi1>, vector<4x256xf32>
    %39 = arith.addf %34, %38 : vector<4x256xf32>
    %c0_15 = arith.constant 0 : index
    %c0_16 = arith.constant 0 : index
    %40 = vector.load %arg9[%c0_15, %c0_16] : memref<4x256xf32, #tpu.memory_space<vmem>>, vector<4x256xf32>
    tpu.vector_store %arg9[%c0_15, %c0_16], %39 {strides = array<i32>} : memref<4x256xf32, #tpu.memory_space<vmem>>, vector<4x256xf32>,
    %c0_17 = arith.constant 0 : index
    %c0_18 = arith.constant 0 : index
    %41 = vector.load %arg10[%c0_17, %c0_18] : memref<4x256xf32, #tpu.memory_space<vmem>>, vector<4x256xf32>
    %42 = arith.extui %30 : vector<4x256xi1> to vector<4x256xi32>
    %43 = arith.sitofp %42 : vector<4x256xi32> to vector<4x256xf32>
    %44 = arith.addf %41, %43 : vector<4x256xf32>
    %c0_19 = arith.constant 0 : index
    %c0_20 = arith.constant 0 : index
    %45 = vector.load %arg10[%c0_19, %c0_20] : memref<4x256xf32, #tpu.memory_space<vmem>>, vector<4x256xf32>
    tpu.vector_store %arg10[%c0_19, %c0_20], %44 {strides = array<i32>} : memref<4x256xf32, #tpu.memory_space<vmem>>, vector<4x256xf32>,
    %c0_i32_21 = arith.constant 0 : i32
    %46 = arith.cmpi eq, %arg2, %c0_i32_21 : i32
    %47 = arith.extui %46 : i1 to i32
    %c0_i32_22 = arith.constant 0 : i32
    %48 = arith.cmpi ne, %47, %c0_i32_22 : i32
    scf.if %48 {
      %c0_23 = arith.constant 0 : index
      %c0_24 = arith.constant 0 : index
      %49 = vector.load %arg8[%c0_23, %c0_24] : memref<4x256xf32, #tpu.memory_space<vmem>>, vector<4x256xf32>
      %cst_25 = arith.constant dense<0.000000e+00> : vector<4xf32>
      %50 = vector.multi_reduction <add>, %49, %cst_25 [1] : vector<4x256xf32> to vector<4xf32>
      %51 = vector.shape_cast %50 : vector<4xf32> to vector<4x1xf32>
      %c0_26 = arith.constant 0 : index
      %c0_27 = arith.constant 0 : index
      %c0_28 = arith.constant 0 : index
      %c0_29 = arith.constant 0 : index
      %52 = vector.load %arg5[%c0_26, %c0_27, %c0_28, %c0_29] : memref<1x1x4x1xf32, #tpu.memory_space<vmem>>, vector<1x1x4x1xf32>
      %53 = vector.shape_cast %52 : vector<1x1x4x1xf32> to vector<4x1xf32>
      %54 = vector.shape_cast %51 : vector<4x1xf32> to vector<1x1x4x1xf32>
      tpu.vector_store %arg5[%c0_26, %c0_27, %c0_28, %c0_29], %54 {strides = array<i32>} : memref<1x1x4x1xf32, #tpu.memory_space<vmem>>, vector<1x1x4x1xf32>,
      %c0_30 = arith.constant 0 : index
      %c0_31 = arith.constant 0 : index
      %55 = vector.load %arg9[%c0_30, %c0_31] : memref<4x256xf32, #tpu.memory_space<vmem>>, vector<4x256xf32>
      %cst_32 = arith.constant dense<0.000000e+00> : vector<4xf32>
      %56 = vector.multi_reduction <add>, %55, %cst_32 [1] : vector<4x256xf32> to vector<4xf32>
      %57 = vector.shape_cast %56 : vector<4xf32> to vector<4x1xf32>
      %c0_33 = arith.constant 0 : index
      %c0_34 = arith.constant 0 : index
      %c0_35 = arith.constant 0 : index
      %c0_36 = arith.constant 0 : index
      %58 = vector.load %arg6[%c0_33, %c0_34, %c0_35, %c0_36] : memref<1x1x4x1xf32, #tpu.memory_space<vmem>>, vector<1x1x4x1xf32>
      %59 = vector.shape_cast %58 : vector<1x1x4x1xf32> to vector<4x1xf32>
      %60 = vector.shape_cast %57 : vector<4x1xf32> to vector<1x1x4x1xf32>
      tpu.vector_store %arg6[%c0_33, %c0_34, %c0_35, %c0_36], %60 {strides = array<i32>} : memref<1x1x4x1xf32, #tpu.memory_space<vmem>>, vector<1x1x4x1xf32>,
      %c0_37 = arith.constant 0 : index
      %c0_38 = arith.constant 0 : index
      %61 = vector.load %arg10[%c0_37, %c0_38] : memref<4x256xf32, #tpu.memory_space<vmem>>, vector<4x256xf32>
      %cst_39 = arith.constant dense<0.000000e+00> : vector<4xf32>
      %62 = vector.multi_reduction <add>, %61, %cst_39 [1] : vector<4x256xf32> to vector<4xf32>
      %63 = vector.shape_cast %62 : vector<4xf32> to vector<4x1xf32>
      %c0_40 = arith.constant 0 : index
      %c0_41 = arith.constant 0 : index
      %c0_42 = arith.constant 0 : index
      %c0_43 = arith.constant 0 : index
      %64 = vector.load %arg7[%c0_40, %c0_41, %c0_42, %c0_43] : memref<1x1x4x1xf32, #tpu.memory_space<vmem>>, vector<1x1x4x1xf32>
      %65 = vector.shape_cast %64 : vector<1x1x4x1xf32> to vector<4x1xf32>
      %66 = vector.shape_cast %63 : vector<4x1xf32> to vector<1x1x4x1xf32>
      tpu.vector_store %arg7[%c0_40, %c0_41, %c0_42, %c0_43], %66 {strides = array<i32>} : memref<1x1x4x1xf32, #tpu.memory_space<vmem>>, vector<1x1x4x1xf32>,
    } else {
    }
    return
  }
  func.func @transform_0(%arg0: i32, %arg1: i32, %arg2: i32) -> (i32, i32, i32) {
    %c1_i32 = arith.constant 1 : i32
    %0 = arith.muli %arg1, %c1_i32 : i32
    %1 = arith.addi %0, %arg2 : i32
    %c0_i32 = arith.constant 0 : i32
    %c0_i32_0 = arith.constant 0 : i32
    return %arg0, %c0_i32, %1 : i32, i32, i32
  }
  func.func @transform_1(%arg0: i32, %arg1: i32, %arg2: i32) -> (i32, i32, i32) {
    %c1_i32 = arith.constant 1 : i32
    %0 = arith.muli %arg1, %c1_i32 : i32
    %1 = arith.addi %0, %arg2 : i32
    %c0_i32 = arith.constant 0 : i32
    %c0_i32_0 = arith.constant 0 : i32
    return %arg0, %c0_i32, %1 : i32, i32, i32
  }
  func.func @transform_2(%arg0: i32, %arg1: i32, %arg2: i32) -> (i32, i32, i32, i32) {
    %c0_i32 = arith.constant 0 : i32
    %c0_i32_0 = arith.constant 0 : i32
    %c0_i32_1 = arith.constant 0 : i32
    return %arg0, %arg1, %c0_i32, %c0_i32_0 : i32, i32, i32, i32
  }
  func.func @transform_3(%arg0: i32, %arg1: i32, %arg2: i32) -> (i32, i32, i32, i32) {
    %c0_i32 = arith.constant 0 : i32
    %c0_i32_0 = arith.constant 0 : i32
    %c0_i32_1 = arith.constant 0 : i32
    return %arg0, %arg1, %c0_i32, %c0_i32_0 : i32, i32, i32, i32
  }
  func.func @transform_4(%arg0: i32, %arg1: i32, %arg2: i32) -> (i32, i32, i32, i32) {
    %c0_i32 = arith.constant 0 : i32
    %c0_i32_0 = arith.constant 0 : i32
    %c0_i32_1 = arith.constant 0 : i32
    return %arg0, %arg1, %c0_i32, %c0_i32_0 : i32, i32, i32, i32
  }
}

</mosaic_0001>

<llo_original>
// kernel: tpu_custom_call.1
$region0: #{tpu_custom_call.1}
  #allocation0 [shape = 'u32[]', space=smem, size = 0x4, offset = 0x4, fixed_abs, tag = 'smem constant byte address 0x4 - core index']
  #allocation1 [shape = 'u32[144,128]{1,0:T(1,128)}', space=vmem, size = 0x12000, scoped, tag = 'internal scratch']
  #allocation2 [shape = 'f32[4,256]{1,0:T(4,128)}', space=vmem, size = 0x1000, scoped, tag = 'scratch operand']
  #allocation3 [shape = 'f32[4,256]{1,0:T(4,128)}', space=vmem, size = 0x1000, scoped, tag = 'scratch operand']
  #allocation4 [shape = 'f32[4,256]{1,0:T(4,128)}', space=vmem, size = 0x1000, scoped, tag = 'scratch operand']
  %s0 = inlined_call_operand.hbm [shape: f32[2,4,256], index: 0, kind: input, shape index: {}]
  %s1 = inlined_call_operand.hbm [shape: s32[2,1,256], index: 1, kind: input, shape index: {}]
  %s2 = inlined_call_operand.vmem [shape: f32[2,1,4,1], index: 2, kind: output, shape index: {0}]
  %s3 = inlined_call_operand.vmem [shape: f32[2,1,4,1], index: 3, kind: output, shape index: {1}]
  %s4 = inlined_call_operand.vmem [shape: f32[2,1,4,1], index: 4, kind: output, shape index: {2}]
  %5 = xla_tuple %s2, %s3, %s4
  %s6 = sld [smem:[#allocation0]]
  $region73: #{tpu_custom_call.1} parent=0
    _
  %s8 = ssub.s32 1, %s6
  %s9 = scalar_select 0, %s8, %s6
  $region1: #{tpu_custom_call.1} parent=0
    #allocation5 [shape = 'u8[8192]{0}', space=vmem, size = 0x2000, scoped, tag = 'input window, operand 0']
    #allocation6 [shape = 's32[2]{0}', space=sflag, size = 0x8, scoped, tag = 'scoped memory for tpu_custom_call.1']
    #allocation7 [shape = 'u8[2048]{0}', space=vmem, size = 0x800, scoped, tag = 'input window, operand 1']
    #allocation8 [shape = 's32[2]{0}', space=sflag, size = 0x8, scoped, tag = 'scoped memory for tpu_custom_call.1']
    %10 = vsyncpa [#allocation6], 0
    %s11 = scalar_lea.sflag [#allocation6], 1
    %12 = vsyncpa %s11, 0
    %13 = vsyncpa [#allocation8], 0
    %s14 = scalar_lea.sflag [#allocation8], 1
    %15 = vsyncpa %s14, 0
    loop: start=0, step=1, limit=4
    $region2: #{tpu_custom_call.1} parent=1 // loop_pre_header
      _
    $region3: #{tpu_custom_call.1} parent=1 // loop_header
      %s17 = sphi 0, %s21
      %p18 = scmp.ge.s32.totalorder %s17, 4
      %s24 = sphi 0, %s43
      %s25 = sphi 0, %s39
      %s26 = sphi 0, %s35
      %s27 = sphi 0, %s24
      %s28 = sphi 0, %s25
      %s29 = sphi 0, %s26
      %s30 = sphi 0, %s27
      %s31 = sphi 0, %s28
      %s32 = sphi 0, %s29
      %s50 = sphi 0, %s52
      %s53 = sphi 0, %s50
      %s54 = sphi 0, %s53
      %s70 = sphi 0, %s54
      %s80 = sphi 0, %s82
      %s83 = sphi 0, %s80
      %s84 = sphi 0, %s83
      %s100 = sphi 0, %s84
      %s108 = sphi 0, %s110
      %s111 = sphi 0, %s108
      %s112 = sphi 0, %s111
      %s128 = sphi 0, %s112
      %s136 = sphi 0, %s138
      %s139 = sphi 0, %s136
      %s140 = sphi 0, %s139
      %s156 = sphi 0, %s140
      %s164 = sphi 0, %s166
      %s167 = sphi 0, %s164
      %s168 = sphi 0, %s167
      %s184 = sphi 0, %s168
    $region4: #{tpu_custom_call.1} parent=1 // loop_header_branch
      %20 = sbr.rel (%p18) target = $region8
    $region5: #{tpu_custom_call.1} parent=1 // loop_body
      %s22 = ssub.s32 %s17, 1
      %s23 = ssub.s32 %s17, 2
      %s33 = sadd.s32 1, %s26
      %p34 = scmp.ge.s32.totalorder %s33, 1
      %s35 = scalar_select %p34, 0, %s33
      %s36 = sadd.s32 1, %s25
      %s37 = scalar_select %p34, %s36, %s25
      %p38 = scmp.ge.s32.totalorder %s37, 1
      %s39 = scalar_select %p38, 0, %s37
      %s40 = sadd.s32 1, %s24
      %s41 = scalar_select %p38, %s40, %s24
      %p42 = scmp.ge.s32.totalorder %s41, 2
      %s43 = scalar_select %p42, 0, %s41
      %s44 = sadd.s32 %s25, %s26
      %s45 = sadd.s32 %s39, %s35
      %s46 = ssub.s32 %s24, %s43
      %s47 = ssub.s32 %s44, %s45
      %s48 = sor.u32 %s46, %s47
      %p49 = scmp.eq.s32.totalorder %s48, 0
      %s51 = sadd.s32 %s50, 1
      %s52 = scalar_select %p49, %s50, %s51
      %p55 = pneg %p49
      %p56 = scmp.eq.s32.totalorder %s17, 1
      %p57 = por %p55, %p56
      %p58 = scmp.ne.s32.totalorder %s50, %s53
      %p59 = scmp.eq.s32.totalorder %s17, 0
      %p60 = por %p58, %p59
      %p61 = scmp.ne.s32.totalorder %s50, %s53
      %p62 = scmp.eq.s32.totalorder %s22, 1
      %p63 = por %p61, %p62
      %p64 = scmp.ne.s32.totalorder %s53, %s54
      %p65 = scmp.eq.s32.totalorder %s22, 0
      %p66 = por %p64, %p65
      %p67 = scmp.ne.s32.totalorder %s53, %s54
      %p68 = scmp.eq.s32.totalorder %s23, 1
      %p69 = por %p67, %p68
      %p71 = scmp.ne.s32.totalorder %s54, %s70
      %p72 = scmp.eq.s32.totalorder %s23, 0
      %p73 = por %p71, %p72
      %s74 = sadd.s32 %s25, %s26
      %s75 = sadd.s32 %s39, %s35
      %s76 = ssub.s32 %s24, %s43
      %s77 = ssub.s32 %s74, %s75
      %s78 = sor.u32 %s76, %s77
      %p79 = scmp.eq.s32.totalorder %s78, 0
      %s81 = sadd.s32 %s80, 1
      %s82 = scalar_select %p79, %s80, %s81
      %p85 = pneg %p79
      %p86 = scmp.eq.s32.totalorder %s17, 1
      %p87 = por %p85, %p86
      %p88 = scmp.ne.s32.totalorder %s80, %s83
      %p89 = scmp.eq.s32.totalorder %s17, 0
      %p90 = por %p88, %p89
      %p91 = scmp.ne.s32.totalorder %s80, %s83
      %p92 = scmp.eq.s32.totalorder %s22, 1
      %p93 = por %p91, %p92
      %p94 = scmp.ne.s32.totalorder %s83, %s84
      %p95 = scmp.eq.s32.totalorder %s22, 0
      %p96 = por %p94, %p95
      %p97 = scmp.ne.s32.totalorder %s83, %s84
      %p98 = scmp.eq.s32.totalorder %s23, 1
      %p99 = por %p97, %p98
      %p101 = scmp.ne.s32.totalorder %s84, %s100
      %p102 = scmp.eq.s32.totalorder %s23, 0
      %p103 = por %p101, %p102
      %s104 = ssub.s32 %s24, %s43
      %s105 = ssub.s32 %s25, %s39
      %s106 = sor.u32 %s104, %s105
      %p107 = scmp.eq.s32.totalorder %s106, 0
      %s109 = sadd.s32 %s108, 1
      %s110 = scalar_select %p107, %s108, %s109
      %p113 = pneg %p107
      %p114 = scmp.eq.s32.totalorder %s17, 1
      %p115 = por %p113, %p114
      %p116 = scmp.ne.s32.totalorder %s108, %s111
      %p117 = scmp.eq.s32.totalorder %s17, 0
      %p118 = por %p116, %p117
      %p119 = scmp.ne.s32.totalorder %s108, %s111
      %p120 = scmp.eq.s32.totalorder %s22, 1
      %p121 = por %p119, %p120
      %p122 = scmp.ne.s32.totalorder %s111, %s112
      %p123 = scmp.eq.s32.totalorder %s22, 0
      %p124 = por %p122, %p123
      %p125 = scmp.ne.s32.totalorder %s111, %s112
      %p126 = scmp.eq.s32.totalorder %s23, 1
      %p127 = por %p125, %p126
      %p129 = scmp.ne.s32.totalorder %s112, %s128
      %p130 = scmp.eq.s32.totalorder %s23, 0
      %p131 = por %p129, %p130
      %s132 = ssub.s32 %s24, %s43
      %s133 = ssub.s32 %s25, %s39
      %s134 = sor.u32 %s132, %s133
      %p135 = scmp.eq.s32.totalorder %s134, 0
      %s137 = sadd.s32 %s136, 1
      %s138 = scalar_select %p135, %s136, %s137
      %p141 = pneg %p135
      %p142 = scmp.eq.s32.totalorder %s17, 1
      %p143 = por %p141, %p142
      %p144 = scmp.ne.s32.totalorder %s136, %s139
      %p145 = scmp.eq.s32.totalorder %s17, 0
      %p146 = por %p144, %p145
      %p147 = scmp.ne.s32.totalorder %s136, %s139
      %p148 = scmp.eq.s32.totalorder %s22, 1
      %p149 = por %p147, %p148
      %p150 = scmp.ne.s32.totalorder %s139, %s140
      %p151 = scmp.eq.s32.totalorder %s22, 0
      %p152 = por %p150, %p151
      %p153 = scmp.ne.s32.totalorder %s139, %s140
      %p154 = scmp.eq.s32.totalorder %s23, 1
      %p155 = por %p153, %p154
      %p157 = scmp.ne.s32.totalorder %s140, %s156
      %p158 = scmp.eq.s32.totalorder %s23, 0
      %p159 = por %p157, %p158
      %s160 = ssub.s32 %s24, %s43
      %s161 = ssub.s32 %s25, %s39
      %s162 = sor.u32 %s160, %s161
      %p163 = scmp.eq.s32.totalorder %s162, 0
      %s165 = sadd.s32 %s164, 1
      %s166 = scalar_select %p163, %s164, %s165
      %p169 = pneg %p163
      %p170 = scmp.eq.s32.totalorder %s17, 1
      %p171 = por %p169, %p170
      %p172 = scmp.ne.s32.totalorder %s164, %s167
      %p173 = scmp.eq.s32.totalorder %s17, 0
      %p174 = por %p172, %p173
      %p175 = scmp.ne.s32.totalorder %s164, %s167
      %p176 = scmp.eq.s32.totalorder %s22, 1
      %p177 = por %p175, %p176
      %p178 = scmp.ne.s32.totalorder %s167, %s168
      %p179 = scmp.eq.s32.totalorder %s22, 0
      %p180 = por %p178, %p179
      %p181 = scmp.ne.s32.totalorder %s167, %s168
      %p182 = scmp.eq.s32.totalorder %s23, 1
      %p183 = por %p181, %p182
      %p185 = scmp.ne.s32.totalorder %s168, %s184
      %p186 = scmp.eq.s32.totalorder %s23, 0
      %p187 = por %p185, %p186
      %p188 = scmp.le.s32.totalorder 1, %s17
      %p189 = scmp.lt.s32.totalorder %s17, 3
      %p190 = pnand %p188, %p189
      %p191 = pneg %p190
      // Predicated region
      $region9: #{tpu_custom_call.1} parent=5 // pred_check
        _
      $region10: #{tpu_custom_call.1} parent=5 // pred_check_branch
        %193 = sbr.rel (%p190) target = $region12
      $region11: #{tpu_custom_call.1} parent=5 // pred_region
        %s194 = ssub.s32 %s17, 1
      $region12: #{tpu_custom_call.1} parent=5 // pred_fallthru
        _
      %p195 = scmp.lt.s32.totalorder %s17, 2
      // Predicated region
      $region13: #{tpu_custom_call.1} parent=5 // pred_check
        %p196 = pneg %p195
      $region14: #{tpu_custom_call.1} parent=5 // pred_check_branch
        %198 = sbr.rel (%p196) target = $region16
      $region15: #{tpu_custom_call.1} parent=5 // pred_region
        // Predicated region
        $region17: #{tpu_custom_call.1} parent=15 // pred_check
          %p199 = pneg %p60
        $region18: #{tpu_custom_call.1} parent=15 // pred_check_branch
          %201 = sbr.rel (%p199) target = $region20
        $region19: #{tpu_custom_call.1} parent=15 // pred_region
          %s202 = sand.u32 %s50, 1
          %s203 = scalar_lea.sflag [#allocation6], %s202
          %s204 = sand.u32 %s50, 1
          %s205 = smul.addr %s204, 8
          %s206 = scalar_lea.vmem [#allocation5], %s205
          %s207 = sadd.s32 %s25, %s26
          %s208 = smul.u32 2, %s207
          %s210 = ssub.s32 128, 128
          %211 = vsyncadd %s203, %s210
          %s212 = smul.addr %s24, 2
          %s213 = sadd.s32 %s208, %s212
          %s214 = smul.addr %s213, 64
          %s215 = scalar_lea.hbm %s0, %s214
          %s217 = sshll.u32 %s206, 4
          %s218 = int_to_ptr.vmem [resolvable:$true] %s217
          %220 = dma.hbm_to_vmem [thread:$0]  %s215, 128, %s218, %s203
        $region20: #{tpu_custom_call.1} parent=15 // pred_fallthru
          _
        // Predicated region
        $region21: #{tpu_custom_call.1} parent=15 // pred_check
          %p221 = pneg %p90
        $region22: #{tpu_custom_call.1} parent=15 // pred_check_branch
          %223 = sbr.rel (%p221) target = $region24
        $region23: #{tpu_custom_call.1} parent=15 // pred_region
          %s224 = sand.u32 %s80, 1
          %s225 = scalar_lea.sflag [#allocation8], %s224
          %s226 = sand.u32 %s80, 1
          %s227 = smul.addr %s226, 2
          %s228 = scalar_lea.vmem [#allocation7], %s227
          %s229 = sadd.s32 %s25, %s26
          %s230 = smul.u32 2, %s229
          %s232 = ssub.s32 32, 32
          %233 = vsyncadd %s225, %s232
          %s234 = smul.addr %s24, 2
          %s235 = sadd.s32 %s230, %s234
          %s236 = smul.addr %s235, 16
          %s237 = scalar_lea.hbm %s1, %s236
          %s239 = sshll.u32 %s228, 4
          %s240 = int_to_ptr.vmem [resolvable:$true] %s239
          %242 = dma.hbm_to_vmem [thread:$0]  %s237, 32, %s240, %s225
        $region24: #{tpu_custom_call.1} parent=15 // pred_fallthru
          _
      $region16: #{tpu_custom_call.1} parent=5 // pred_fallthru
        _
      %p243 = scmp.le.s32.totalorder 1, %s17
      %p244 = scmp.lt.s32.totalorder %s17, 3
      %p245 = pnand %p243, %p244
      %p246 = pneg %p245
      // Predicated region
      $region25: #{tpu_custom_call.1} parent=5 // pred_check
        _
      $region26: #{tpu_custom_call.1} parent=5 // pred_check_branch
        %248 = sbr.rel (%p245) target = $region28
      $region27: #{tpu_custom_call.1} parent=5 // pred_region
        %s249 = ssub.s32 %s17, 1
        %s250 = sand.u32 %s53, 1
        %s251 = scalar_lea.sflag [#allocation6], %s250
        %s252 = sand.u32 %s53, 1
        %s253 = smul.addr %s252, 8
        %s254 = scalar_lea.vmem [#allocation5], %s253
        // Predicated region
        $region29: #{tpu_custom_call.1} parent=27 // pred_check
          %p255 = pneg %p66
        $region30: #{tpu_custom_call.1} parent=27 // pred_check_branch
          %257 = sbr.rel (%p255) target = $region32
        $region31: #{tpu_custom_call.1} parent=27 // pred_region
          %258 = dma.done %s251, 128
        $region32: #{tpu_custom_call.1} parent=27 // pred_fallthru
          _
        %s259 = sand.u32 %s83, 1
        %s260 = scalar_lea.sflag [#allocation8], %s259
        %s261 = sand.u32 %s83, 1
        %s262 = smul.addr %s261, 2
        %s263 = scalar_lea.vmem [#allocation7], %s262
        // Predicated region
        $region33: #{tpu_custom_call.1} parent=27 // pred_check
          %p264 = pneg %p96
        $region34: #{tpu_custom_call.1} parent=27 // pred_check_branch
          %266 = sbr.rel (%p264) target = $region36
        $region35: #{tpu_custom_call.1} parent=27 // pred_region
          %267 = dma.done %s260, 32
        $region36: #{tpu_custom_call.1} parent=27 // pred_fallthru
          _
        %s268 = sand.u32 %s53, 1
        %s269 = scalar_lea.sflag [#allocation6], %s268
        %s270 = sand.u32 %s53, 1
        %s271 = smul.addr %s270, 8
        %s272 = scalar_lea.vmem [#allocation5], %s271
        %p273 = pneg %p66
        %p274 = pneg %p63
        %s275 = sand.u32 %s83, 1
        %s276 = scalar_lea.sflag [#allocation8], %s275
        %s277 = sand.u32 %s83, 1
        %s278 = smul.addr %s277, 2
        %s279 = scalar_lea.vmem [#allocation7], %s278
        %p280 = pneg %p96
        %p281 = pneg %p93
        %p282 = pneg %p124
        %p283 = pneg %p121
        %p284 = scmp.lt.s32.totalorder %s27, 1
        %s285 = scalar_select %p284, %s27, 1
        %p286 = scmp.lt.s32.totalorder %s28, 0
        %s287 = scalar_select %p286, %s28, 0
        %s288 = sadd.s32 %s287, %s285
        %s289 = smul.addr %s288, 4
        %s290 = scalar_lea.vmem %s2, %s289
        %p291 = pneg %p152
        %p292 = pneg %p149
        %p293 = scmp.lt.s32.totalorder %s27, 1
        %s294 = scalar_select %p293, %s27, 1
        %p295 = scmp.lt.s32.totalorder %s28, 0
        %s296 = scalar_select %p295, %s28, 0
        %s297 = sadd.s32 %s296, %s294
        %s298 = smul.addr %s297, 4
        %s299 = scalar_lea.vmem %s3, %s298
        %p300 = pneg %p180
        %p301 = pneg %p177
        %p302 = scmp.lt.s32.totalorder %s27, 1
        %s303 = scalar_select %p302, %s27, 1
        %p304 = scmp.lt.s32.totalorder %s28, 0
        %s305 = scalar_select %p304, %s28, 0
        %s306 = sadd.s32 %s305, %s303
        %s307 = smul.addr %s306, 4
        %s308 = scalar_lea.vmem %s4, %s307
        %s309 = sadd.s32 %s28, %s29
        %s310 = smul.u32 2, %s309
        %s311 = sadd.s32 %s28, %s29
        %s312 = smul.u32 2, %s311
        %p313 = scmp.lt.s32.totalorder %s27, 1
        %s314 = scalar_select %p313, %s27, 1
        %p315 = scmp.lt.s32.totalorder %s28, 0
        %s316 = scalar_select %p315, %s28, 0
        %s317 = sadd.s32 %s316, %s314
        %s318 = smul.addr %s317, 4
        %s319 = scalar_lea.vmem %s2, %s318
        %p320 = scmp.lt.s32.totalorder %s27, 1
        %s321 = scalar_select %p320, %s27, 1
        %p322 = scmp.lt.s32.totalorder %s28, 0
        %s323 = scalar_select %p322, %s28, 0
        %s324 = sadd.s32 %s323, %s321
        %s325 = smul.addr %s324, 4
        %s326 = scalar_lea.vmem %s3, %s325
        %p327 = scmp.lt.s32.totalorder %s27, 1
        %s328 = scalar_select %p327, %s27, 1
        %p329 = scmp.lt.s32.totalorder %s28, 0
        %s330 = scalar_select %p329, %s28, 0
        %s331 = sadd.s32 %s330, %s328
        %s332 = smul.addr %s331, 4
        %s333 = scalar_lea.vmem %s4, %s332
        %p334 = scmp.eq.s32.totalorder %s29, 0
        // Predicated region
        $region37: #{tpu_custom_call.1} parent=27 // pred_check
          %p335 = pneg %p334
        $region38: #{tpu_custom_call.1} parent=27 // pred_check_branch
          %337 = sbr.rel (%p335) target = $region40
        $region39: #{tpu_custom_call.1} parent=27 // pred_region
          %338 = vst [vmem:[#allocation2] sm:$0xff] 0.0
          %339 = vst [vmem:[#allocation3] sm:$0xff] 0.0
          %340 = vst [vmem:[#allocation4] sm:$0xff] 0.0
        $region40: #{tpu_custom_call.1} parent=27 // pred_fallthru
          _
        %v341 = vld [vmem:[%s254] sm:$0xff]
        %v342 = vld [vmem:[%s263] sm:$0x3]
        %v344 = vcombine.high %v341, %v341
        %vm346 = vcmask 1043456
        %v347 = vsel %vm346, %v341, -inf
        %v348 = vrot.slane %v347, 4
        %v349 = vmax.f32 %v347, %v348
        %v350 = vrot.slane %v349, 2
        %v351 = vmax.f32 %v349, %v350
        %v352 = vrot.slane %v351, 1
        %v353 = vmax.f32 %v351, %v352
        %v354 = vsel %vm346, %v344, -inf
        %v355 = vrot.slane %v354, 4
        %v356 = vmax.f32 %v354, %v355
        %v357 = vrot.slane %v356, 2
        %v358 = vmax.f32 %v356, %v357
        %v359 = vrot.slane %v358, 1
        %v360 = vmax.f32 %v358, %v359
        %v363 = vcombine.low %v353, %v360
        %v365 = vsub.f32 %v341, %v363
        %v366 = vmul.f32 %v365, 1.442695
        %v367 = vpow.pop %v366
        %v369 = vcombine.high %v367, %v367
        %v371 = vsel %vm346, %v367, 0.0
        %v372 = vrot.slane %v371, 4
        %v373 = vadd.f32 %v371, %v372
        %v374 = vrot.slane %v373, 2
        %v375 = vadd.f32 %v373, %v374
        %v376 = vrot.slane %v375, 1
        %v377 = vadd.f32 %v375, %v376
        %v378 = vsel %vm346, %v369, 0.0
        %v379 = vrot.slane %v378, 4
        %v380 = vadd.f32 %v378, %v379
        %v381 = vrot.slane %v380, 2
        %v382 = vadd.f32 %v380, %v381
        %v383 = vrot.slane %v382, 1
        %v384 = vadd.f32 %v382, %v383
        %v385 = vrcp.pop %v377
        %v386 = vrcp.pop %v384
        %v387 = vmul.f32 %v377, %v385
        %v388 = vmul.f32 %v384, %v386
        %v389 = vsub.f32 2.0, %v387
        %v390 = vsub.f32 2.0, %v388
        %v391 = vmul.f32 %v385, %v389
        %v392 = vmul.f32 %v386, %v390
        %v395 = vcombine.low %v391, %v392
        %v397 = vmul.f32 %v367, %v395
        %v398 = vlog2.pop %v377
        %v399 = vmul.f32 %v398, 0.6931472
        %v400 = vlog2.pop %v384
        %v401 = vmul.f32 %v400, 0.6931472
        %v402 = vadd.f32 %v353, %v399
        %v403 = vadd.f32 %v360, %v401
        %v404 = vlaneseq
        %v405 = vshrl.u32 %v404, 7
        %v406 = vlaneseq
        %v407 = vshrl.u32 %v406, 7
        %v408 = vsub.s32 0, %v407
        %v409 = vrot.slane %v342, %v408
        %v410 = vlaneseq
        %v411 = vshrl.u32 %v410, 7
        %v412 = vsub.s32 1, %v411
        %v413 = vrot.slane %v342, %v412
        %vm414 = vcmp.eq.s32.totalorder %v405, %v409
        %vm415 = vcmp.eq.s32.totalorder %v405, %v413
        %vm416 = vcmp.ne.s32.totalorder %v342, 4294967295
        %v417 = vsel %vm416, 1, 0
        %v418 = vlaneseq
        %v419 = vshrl.u32 %v418, 7
        %v420 = vsub.s32 0, %v419
        %v421 = vrot.slane %v417, %v420
        %v422 = vlaneseq
        %v423 = vshrl.u32 %v422, 7
        %v424 = vsub.s32 1, %v423
        %v425 = vrot.slane %v417, %v424
        %vm426 = vcmp.eq.s32.totalorder %v421, 1
        %vm427 = vcmp.eq.s32.totalorder %v425, 1
        %vm428 = vmand %vm414, %vm426
        %vm429 = vmand %vm415, %vm427
        %v430 = vld [vmem:[#allocation2] sm:$0xff]
        %v431 = vadd.f32 %v430, %v397
        %432 = vst [vmem:[#allocation2] sm:$0xff] %v431
        %v433 = vld [vmem:[#allocation3] sm:$0xff]
        %v434 = vsub.f32 %v402, %v341
        %v435 = vsub.f32 %v403, %v344
        %v436 = vsel %vm428, %v434, 0.0
        %v437 = vsel %vm429, %v435, 0.0
        %v440 = vcombine.low %v436, %v437
        %v442 = vadd.f32 %v433, %v440
        %443 = vst [vmem:[#allocation3] sm:$0xff] %v442
        %v444 = vld [vmem:[#allocation4] sm:$0xff]
        %v445 = vsel %vm428, 1, 0
        %v446 = vsel %vm429, 1, 0
        %v447 = vcvt.s32.f32 %v445
        %v448 = vcvt.s32.f32 %v446
        %v451 = vcombine.low %v447, %v448
        %v453 = vadd.f32 %v444, %v451
        %454 = vst [vmem:[#allocation4] sm:$0xff] %v453
        // Predicated region
        $region41: #{tpu_custom_call.1} parent=27 // pred_check
          %p455 = pneg %p334
        $region42: #{tpu_custom_call.1} parent=27 // pred_check_branch
          %457 = sbr.rel (%p455) target = $region44
        $region43: #{tpu_custom_call.1} parent=27 // pred_region
          %v458 = vld [vmem:[#allocation2] sm:$0xff]
          %v460 = vcombine.high %v458, %v458
          %v462 = vsel %vm346, %v458, 0.0
          %v463 = vsel %vm346, %v460, 0.0
          %v464 = vadd.f32 %v462, %v463
          %465 = vadd.xlane.f32.xlu0 %v464
          %v466 = vpop.xlane.xlu0 %465
          %vm467 = vcmask 3072
          %468 = vst.msk [vmem:[%s319] sm:$0xf] %vm467, %v466
          %v469 = vld [vmem:[#allocation3] sm:$0xff]
          %v471 = vcombine.high %v469, %v469
          %v473 = vsel %vm346, %v469, 0.0
          %v474 = vsel %vm346, %v471, 0.0
          %v475 = vadd.f32 %v473, %v474
          %476 = vadd.xlane.f32.xlu0 %v475
          %v477 = vpop.xlane.xlu0 %476
          %478 = vst.msk [vmem:[%s326] sm:$0xf] %vm467, %v477
          %v479 = vld [vmem:[#allocation4] sm:$0xff]
          %v481 = vcombine.high %v479, %v479
          %v483 = vsel %vm346, %v479, 0.0
          %v484 = vsel %vm346, %v481, 0.0
          %v485 = vadd.f32 %v483, %v484
          %486 = vadd.xlane.f32.xlu0 %v485
          %v487 = vpop.xlane.xlu0 %486
          %488 = vst.msk [vmem:[%s333] sm:$0xf] %vm467, %v487
        $region44: #{tpu_custom_call.1} parent=27 // pred_fallthru
          _
        %p489 = scmp.lt.s32.totalorder %s27, 1
        %s490 = scalar_select %p489, %s27, 1
        %p491 = scmp.lt.s32.totalorder %s28, 0
        %s492 = scalar_select %p491, %s28, 0
        %s493 = sadd.s32 %s492, %s490
        %s494 = smul.addr %s493, 4
        %s495 = scalar_lea.vmem %s2, %s494
        %p496 = scmp.lt.s32.totalorder %s27, 1
        %s497 = scalar_select %p496, %s27, 1
        %p498 = scmp.lt.s32.totalorder %s28, 0
        %s499 = scalar_select %p498, %s28, 0
        %s500 = sadd.s32 %s499, %s497
        %s501 = smul.addr %s500, 4
        %s502 = scalar_lea.vmem %s3, %s501
        %p503 = scmp.lt.s32.totalorder %s27, 1
        %s504 = scalar_select %p503, %s27, 1
        %p505 = scmp.lt.s32.totalorder %s28, 0
        %s506 = scalar_select %p505, %s28, 0
        %s507 = sadd.s32 %s506, %s504
        %s508 = smul.addr %s507, 4
        %s509 = scalar_lea.vmem %s4, %s508
        // Predicated region
        $region45: #{tpu_custom_call.1} parent=27 // pred_check
          %p510 = pneg %p121
        $region46: #{tpu_custom_call.1} parent=27 // pred_check_branch
          %512 = sbr.rel (%p510) target = $region48
        $region47: #{tpu_custom_call.1} parent=27 // pred_region
          _
        $region48: #{tpu_custom_call.1} parent=27 // pred_fallthru
          _
        // Predicated region
        $region49: #{tpu_custom_call.1} parent=27 // pred_check
          %p513 = pneg %p149
        $region50: #{tpu_custom_call.1} parent=27 // pred_check_branch
          %515 = sbr.rel (%p513) target = $region52
        $region51: #{tpu_custom_call.1} parent=27 // pred_region
          _
        $region52: #{tpu_custom_call.1} parent=27 // pred_fallthru
          _
        // Predicated region
        $region53: #{tpu_custom_call.1} parent=27 // pred_check
          %p516 = pneg %p177
        $region54: #{tpu_custom_call.1} parent=27 // pred_check_branch
          %518 = sbr.rel (%p516) target = $region56
        $region55: #{tpu_custom_call.1} parent=27 // pred_region
          _
        $region56: #{tpu_custom_call.1} parent=27 // pred_fallthru
          _
      $region28: #{tpu_custom_call.1} parent=5 // pred_fallthru
        _
      %p519 = scmp.le.s32.totalorder 2, %s17
      // Predicated region
      $region57: #{tpu_custom_call.1} parent=5 // pred_check
        %p520 = pneg %p519
      $region58: #{tpu_custom_call.1} parent=5 // pred_check_branch
        %522 = sbr.rel (%p520) target = $region60
      $region59: #{tpu_custom_call.1} parent=5 // pred_region
        %s523 = ssub.s32 %s17, 2
        // Predicated region
        $region61: #{tpu_custom_call.1} parent=59 // pred_check
          %p524 = pneg %p127
        $region62: #{tpu_custom_call.1} parent=59 // pred_check_branch
          %526 = sbr.rel (%p524) target = $region64
        $region63: #{tpu_custom_call.1} parent=59 // pred_region
          %p527 = scmp.lt.s32.totalorder %s30, 1
          %s528 = scalar_select %p527, %s30, 1
          %p529 = scmp.lt.s32.totalorder %s31, 0
          %s530 = scalar_select %p529, %s31, 0
          %s531 = sadd.s32 %s530, %s528
          %s532 = smul.addr %s531, 4
          %s533 = scalar_lea.vmem %s2, %s532
        $region64: #{tpu_custom_call.1} parent=59 // pred_fallthru
          _
        // Predicated region
        $region65: #{tpu_custom_call.1} parent=59 // pred_check
          %p534 = pneg %p155
        $region66: #{tpu_custom_call.1} parent=59 // pred_check_branch
          %536 = sbr.rel (%p534) target = $region68
        $region67: #{tpu_custom_call.1} parent=59 // pred_region
          %p537 = scmp.lt.s32.totalorder %s30, 1
          %s538 = scalar_select %p537, %s30, 1
          %p539 = scmp.lt.s32.totalorder %s31, 0
          %s540 = scalar_select %p539, %s31, 0
          %s541 = sadd.s32 %s540, %s538
          %s542 = smul.addr %s541, 4
          %s543 = scalar_lea.vmem %s3, %s542
        $region68: #{tpu_custom_call.1} parent=59 // pred_fallthru
          _
        // Predicated region
        $region69: #{tpu_custom_call.1} parent=59 // pred_check
          %p544 = pneg %p183
        $region70: #{tpu_custom_call.1} parent=59 // pred_check_branch
          %546 = sbr.rel (%p544) target = $region72
        $region71: #{tpu_custom_call.1} parent=59 // pred_region
          %p547 = scmp.lt.s32.totalorder %s30, 1
          %s548 = scalar_select %p547, %s30, 1
          %p549 = scmp.lt.s32.totalorder %s31, 0
          %s550 = scalar_select %p549, %s31, 0
          %s551 = sadd.s32 %s550, %s548
          %s552 = smul.addr %s551, 4
          %s553 = scalar_lea.vmem %s4, %s552
        $region72: #{tpu_custom_call.1} parent=59 // pred_fallthru
          _
      $region60: #{tpu_custom_call.1} parent=5 // pred_fallthru
        _
    $region6: #{tpu_custom_call.1} parent=1 // loop_footer
      %s21 = sadd.s32 1, %s17
    $region7: #{tpu_custom_call.1} parent=1 // loop_footer_branch
      %16 = sbr.rel target = $region3
    $region8: #{tpu_custom_call.1} parent=1 // loop_exit
      _
    %554 = vsyncpa [#allocation6], 1
    %s555 = scalar_lea.sflag [#allocation6], 1
    %556 = vsyncpa %s555, 1
    %557 = vsyncpa [#allocation8], 1
    %s558 = scalar_lea.sflag [#allocation8], 1
    %559 = vsyncpa %s558, 1

</llo_original>
